<compile_context>
chip_gen: v7x
topology: tpu7x:2x2x1
jax: 0.10.0
libtpu: 0.0.40
codegen_flags: <defaults>
</compile_context>

<pallas_src>
import jax
import jax.numpy as jnp
from jax.experimental import pallas as pl
from jax.experimental.pallas import tpu as pltpu


# ------------------------------ kernel body ---------------------------------

def _pos_emb_kernel(w_ref, o_ref):
    # w_ref: (1, tl) slice of the folded embedding row (resident / re-fetched).
    # o_ref: (bb, tl) lane-dense output block for this (batch, L) tile.
    o_ref[...] = jnp.broadcast_to(w_ref[...], o_ref.shape)


# ---------------------------- hardware queries -------------------------------

def _vmem_capacity_bytes():
    """Physical VMEM per core; conservative default if the query fails."""
    try:
        return int(pltpu.get_tpu_info().vmem_capacity_bytes)
    except Exception:
        return 64 << 20  # v7x has the smallest VMEM; safe everywhere.


def _num_tensorcores():
    """TensorCores a 'parallel' grid axis can be sharded over (1 on v5e/v6e)."""
    try:
        info = pltpu.get_tpu_info()
        for attr in ("num_cores", "tensor_cores_per_chip", "cores_per_chip"):
            v = getattr(info, attr, None)
            if v:
                return max(1, int(v))
    except Exception:
        pass
    try:
        kind = jax.devices()[0].device_kind.lower()
        if "v7" in kind:
            return 2
    except Exception:
        pass
    return 1


# ---------------------------- tiling heuristics -------------------------------

def _cdiv(a, b):
    return -(-a // b)


def _round_down(x, m):
    return (x // m) * m


def _round_up(x, m):
    return _cdiv(x, m) * m


def _sanitize_bb(bb, batch):
    """Batch-block rows: must be a multiple of 8 or the full batch."""
    bb = max(1, min(int(bb), batch))
    if bb >= batch or batch <= 8:
        return batch
    return max(8, _round_down(bb, 8))


def _sanitize_tl(tl, L):
    """L-block width: must be a multiple of 128 or the full row length L."""
    tl = max(1, min(int(tl), L))
    if tl >= L or L <= 128:
        return L
    return max(128, _round_down(tl, 128))


def _choose_tiles(batch, L, itemsize, vmem_bytes, num_cores, out_bytes,
                  block_batch=None, block_len=None):
    """Pick (bb, tl): multi-MiB, VMEM-safe output blocks on every generation."""
    row_bytes = max(L * itemsize, 1)
    # Budget assumes a single-buffered resident weight row plus headroom.
    budget = max(int(vmem_bytes * 0.85) - row_bytes, 2 << 20)
    # Output blocks are double-buffered by the pipeline.  Bigger blocks on v7x
    # (2 TCs, 3.2 TB/s) amortize the ~0.35 us/step overhead; single-TC v5e/v6e
    # just take the largest block that fits (no forced splitting).
    cap = (24 << 20) if num_cores >= 2 else (32 << 20)
    target = max(min(budget // 2, cap), 1 << 20)

    # Explicit overrides (tuning / tests).
    if block_batch is not None or block_len is not None:
        tl = _sanitize_tl(block_len, L) if block_len is not None else L
        if block_batch is not None:
            bb = _sanitize_bb(block_batch, batch)
        else:
            bb = _sanitize_bb(target // max(1, tl * itemsize), batch)
        return bb, tl

    min_rows = batch if batch <= 8 else 8
    if min_rows * row_bytes <= target:
        # Full lane-dense rows; chunk over batch only.
        tl = L
        bb = _sanitize_bb(target // row_bytes, batch)
        # Megacore balance (v7x): even (>=2) step count so both TCs finish
        # together; never shrink below the 8-row sublane minimum.
        if num_cores >= 2 and out_bytes >= (4 << 20) and batch > 8:
            nb = _cdiv(batch, bb)
            if nb < 2 or nb % 2 == 1:
                nb_even = max(2, nb + (nb % 2))
                bb_even = _round_up(_cdiv(batch, nb_even), 8)
                if 8 <= bb_even < batch:
                    bb = bb_even
    else:
        # Row too large for one VMEM block: tile along L too, keeping blocks
        # bounded instead of promoting to the full batch (old failure mode).
        bb = min_rows
        tl = _sanitize_tl(target // (bb * itemsize), L)
    return bb, tl


def _weight_spec(tl, single_buffered):
    index_map = lambda b, l: (0, l)
    if single_buffered:
        try:
            # Constant block across the whole grid -> one VMEM buffer suffices.
            return pl.BlockSpec((1, tl), index_map,
                                pipeline_mode=pl.Buffered(1))
        except Exception:
            pass  # BlockSpec without pipeline_mode support: fall back.
    return pl.BlockSpec((1, tl), index_map)


# -------------------------------- wrapper ------------------------------------

def positional_embedding(x, weight, *, block_batch=None, block_len=None,
                         min_out_bytes_for_pallas=None):
    """Replicates PositionalEmbedding.forward: broadcast weight over batch.

    Args:
      x: (batch, seq_len) token ids (only batch size is used, as in PyTorch).
      weight: (max_len, d_model) positional-embedding table.
      block_batch / block_len: optional tile-size overrides (tuning / tests).
      min_out_bytes_for_pallas: below this output size use jnp.broadcast_to
        (kernel launch overhead beats a tiny copy).  Default is chip-aware.

    Returns:
      (batch, max_len, d_model) array == weight broadcast over batch.
    """
    batch = x.shape[0]
    max_len, d_model = weight.shape
    out_shape3d = (batch, max_len, d_model)

    itemsize = jnp.dtype(weight.dtype).itemsize
    L = max_len * d_model
    row_bytes = L * itemsize
    out_bytes = batch * row_bytes

    num_cores = _num_tensorcores()
    if min_out_bytes_for_pallas is None:
        # At v7x bandwidth a ~1 MiB output writes in ~0.3 us; XLA's broadcast
        # wins until a few MiB there.  Lower crossover on v5e/v6e.
        min_out_bytes_for_pallas = (4 << 20) if num_cores >= 2 else (1 << 20)

    # Tiny / empty outputs: XLA's broadcast is effectively free.
    if batch == 0 or L == 0 or out_bytes < min_out_bytes_for_pallas:
        return jnp.broadcast_to(weight[None, :, :], out_shape3d)

    vmem_bytes = _vmem_capacity_bytes()
    bb, tl = _choose_tiles(batch, L, itemsize, vmem_bytes, num_cores, out_bytes,
                           block_batch=block_batch, block_len=block_len)

    nb = _cdiv(batch, bb)
    nl = _cdiv(L, tl)
    single_buffer_weight = (nl == 1)   # constant index map -> 1 buffer enough

    w_block_bytes = tl * itemsize
    o_block_bytes = bb * tl * itemsize
    need = ((1 if single_buffer_weight else 2) * w_block_bytes
            + 2 * o_block_bytes + (1 << 20))
    vmem_limit = int(min(max(need, 16 << 20), int(vmem_bytes * 0.95)))

    # Lane-dense folding: (max_len, d_model) -> one row of length L.
    w_flat = weight.reshape(1, L)

    out2d = pl.pallas_call(
        _pos_emb_kernel,
        out_shape=jax.ShapeDtypeStruct((batch, L), weight.dtype),
        grid_spec=pltpu.PrefetchScalarGridSpec(
            num_scalar_prefetch=0,
            grid=(nb, nl),
            in_specs=[_weight_spec(tl, single_buffer_weight)],
            out_specs=pl.BlockSpec((bb, tl), lambda b, l: (b, l)),
        ),
        compiler_params=pltpu.CompilerParams(
            dimension_semantics=("parallel", "parallel"),
            vmem_limit_bytes=vmem_limit,
        ),
        cost_estimate=pl.CostEstimate(
            flops=0,
            transcendentals=0,
            bytes_accessed=out_bytes + nb * row_bytes,
        ),
    )(w_flat)

    return out2d.reshape(out_shape3d)


if __name__ == "__main__":
    key = jax.random.PRNGKey(0)
    k_w, k_x, k_w2, k_x2, k_x3 = jax.random.split(key, 5)

    # ---- Case 1: module-spec small shapes, force the Pallas path ----
    batch, seq_len, max_len, d_model = 2, 8, 16, 32
    weight = jax.random.normal(k_w, (max_len, d_model), dtype=jnp.float32)
    x = jax.random.randint(k_x, (batch, seq_len), 0, max_len, dtype=jnp.int32)

    ref = jnp.broadcast_to(weight[None, :, :], (batch, max_len, d_model))
    out = jax.block_until_ready(
        positional_embedding(x, weight, min_out_bytes_for_pallas=0))
    assert out.shape == ref.shape
    assert out.dtype == weight.dtype
    assert jnp.array_equal(out, ref)

    # ---- Case 2: batch chunking with a partial last block ----
    batch2 = 20
    weight2 = jax.random.normal(k_w2, (max_len, d_model), dtype=jnp.float32)
    x2 = jax.random.randint(k_x2, (batch2, seq_len), 0, max_len, dtype=jnp.int32)
    ref2 = jnp.broadcast_to(weight2[None, :, :], (batch2, max_len, d_model))
    out2 = jax.block_until_ready(
        positional_embedding(x2, weight2, block_batch=8,
                             min_out_bytes_for_pallas=0))
    assert jnp.array_equal(out2, ref2)

    # ---- Case 3: L-tiled path (large-row robustness fix), forced small ----
    out3 = jax.block_until_ready(
        positional_embedding(x2, weight2, block_len=128,
                             min_out_bytes_for_pallas=0))
    assert jnp.array_equal(out3, ref2)

    # ---- Case 4: automatic tile selection with batch > 8 ----
    batch4 = 48
    x4 = jax.random.randint(k_x3, (batch4, seq_len), 0, max_len, dtype=jnp.int32)
    ref4 = jnp.broadcast_to(weight2[None, :, :], (batch4, max_len, d_model))
    out4 = jax.block_until_ready(
        positional_embedding(x4, weight2, min_out_bytes_for_pallas=0))
    assert jnp.array_equal(out4, ref4)

    # ---- Case 5: default small-output fallback (pure XLA broadcast) ----
    out5 = jax.block_until_ready(positional_embedding(x, weight))
    assert jnp.array_equal(out5, ref)

    print("KERNEL_OK")
</pallas_src>

<mosaic_0001>
module attributes {stable_mosaic.version = 11 : i64} {
  func.func @_pos_emb_kernel(%arg0: i32, %arg1: i32, %arg2: memref<1x512xf32, #tpu.memory_space<vmem>>, %arg3: memref<2x512xf32, #tpu.memory_space<vmem>>) attributes {dimension_semantics = [#tpu.dimension_semantics<parallel>, #tpu.dimension_semantics<parallel>], iteration_bounds = array<i64: 1, 1>, scalar_prefetch = 0 : i64, scratch_operands = 0 : i64, tpu.core_type = #tpu.core_type<tc>, window_params = [{pipeline_mode = #tpu.pipeline_mode<synchronous>, transform_indices = @transform_0, window_bounds = array<i64: 1, 512>}, {transform_indices = @transform_1, window_bounds = array<i64: 2, 512>}]} {
    %c0 = arith.constant 0 : index
    %c0_0 = arith.constant 0 : index
    %0 = vector.load %arg2[%c0, %c0_0] : memref<1x512xf32, #tpu.memory_space<vmem>>, vector<1x512xf32>
    %1 = vector.shape_cast %0 : vector<1x512xf32> to vector<1x512xf32>
    %2 = vector.broadcast %1 : vector<1x512xf32> to vector<2x512xf32>
    %c0_1 = arith.constant 0 : index
    %c0_2 = arith.constant 0 : index
    %3 = vector.load %arg3[%c0_1, %c0_2] : memref<2x512xf32, #tpu.memory_space<vmem>>, vector<2x512xf32>
    tpu.vector_store %arg3[%c0_1, %c0_2], %2 {strides = array<i32>} : memref<2x512xf32, #tpu.memory_space<vmem>>, vector<2x512xf32>,
    return
  }
  func.func @transform_0(%arg0: i32, %arg1: i32) -> (i32, i32) {
    %c0_i32 = arith.constant 0 : i32
    %c0_i32_0 = arith.constant 0 : i32
    return %c0_i32, %arg1 : i32, i32
  }
  func.func @transform_1(%arg0: i32, %arg1: i32) -> (i32, i32) {
    %c0_i32 = arith.constant 0 : i32
    return %arg0, %arg1 : i32, i32
  }
}

</mosaic_0001>

<llo_original>
// kernel: tpu_custom_call.1
$region0: #{tpu_custom_call.1}
  #allocation0 [shape = 'u32[]', space=smem, size = 0x4, offset = 0x4, fixed_abs, tag = 'smem constant byte address 0x4 - core index']
  #allocation1 [shape = 'u32[144,128]{1,0:T(1,128)}', space=vmem, size = 0x12000, scoped, tag = 'internal scratch']
  %s0 = inlined_call_operand.hbm [shape: f32[1,512], index: 0, kind: input, shape index: {}]
  %s1 = inlined_call_operand.hbm [shape: f32[2,512], index: 1, kind: output, shape index: {}]
  %s2 = sld [smem:[#allocation0]]
  $region18: #{tpu_custom_call.1} parent=0
    _
  %s4 = ssub.s32 1, %s2
  %s5 = scalar_select 0, %s4, %s2
  $region1: #{tpu_custom_call.1} parent=0
    #allocation2 [shape = 'u8[2048]{0}', space=vmem, size = 0x800, scoped, tag = 'input window, operand 0, single buffered']
    #allocation3 [shape = 's32[1]{0}', space=sflag, size = 0x4, scoped, tag = 'scoped memory for tpu_custom_call.1']
    #allocation4 [shape = 's32[1]{0}', space=sflag, size = 0x4, scoped, tag = 'scoped memory for tpu_custom_call.1']
    #allocation5 [shape = 'u8[4096]{0}', space=vmem, size = 0x1000, scoped, tag = 'output window, operand 0, single buffered']
    %6 = vsyncpa [#allocation3], 0
    %7 = vsyncpa [#allocation4], 0
    // Predicated region
    $region2: #{tpu_custom_call.1} parent=1 // pred_check
      _
    $region3: #{tpu_custom_call.1} parent=1 // pred_check_branch
      %9 = sbr.rel (0) target = $region5
    $region4: #{tpu_custom_call.1} parent=1 // pred_region
      %s11 = ssub.s32 64, 64
      %12 = vsyncadd [#allocation3], %s11
      %s14 = sshll.u32 [#allocation2], 4
      %s15 = int_to_ptr.vmem [resolvable:$true] %s14
      %17 = dma.hbm_to_vmem [thread:$0]  %s0, 64, %s15, [#allocation3]
    $region5: #{tpu_custom_call.1} parent=1 // pred_fallthru
      _
    // Predicated region
    $region6: #{tpu_custom_call.1} parent=1 // pred_check
      _
    $region7: #{tpu_custom_call.1} parent=1 // pred_check_branch
      %19 = sbr.rel (0) target = $region9
    $region8: #{tpu_custom_call.1} parent=1 // pred_region
      %20 = dma.done [#allocation3], 64
    $region9: #{tpu_custom_call.1} parent=1 // pred_fallthru
      _
    %v21 = vld [vmem:[#allocation2] sm:$0xf]
    %v23 = vlaneseq
    %v24 = vshrl.u32 %v23, 7
    %v25 = vsub.s32 0, %v24
    %v26 = vrot.slane %v21, %v25
    %v27 = vlaneseq
    %v28 = vshrl.u32 %v27, 7
    %v29 = vsub.s32 1, %v28
    %v30 = vrot.slane %v21, %v29
    %v31 = vlaneseq
    %v32 = vshrl.u32 %v31, 7
    %v33 = vsub.s32 2, %v32
    %v34 = vrot.slane %v21, %v33
    %v35 = vlaneseq
    %v36 = vshrl.u32 %v35, 7
    %v37 = vsub.s32 3, %v36
    %v38 = vrot.slane %v21, %v37
    %v39 = vcombine.low %v26, %v30
    %v40 = vcombine.low %v34, %v38
    %v42 = vunpack.c.l.s4 1983009808
    %v43 = vunpack.c.0.s8 %v42
    %v44 = vlaneseq
    %v45 = vshrl.u32 %v44, 7
    %v46 = vsub.s32 %v43, %v45
    %v47 = vrot.slane %v39, %v46
    %v49 = vunpack.c.l.s4 1983009808
    %v50 = vunpack.c.0.s8 %v49
    %v51 = vlaneseq
    %v52 = vshrl.u32 %v51, 7
    %v53 = vsub.s32 %v50, %v52
    %v54 = vrot.slane %v40, %v53
    %v55 = vcombine.low %v47, %v54
    %57 = vst [vmem:[#allocation5] sm:$0xff] %v55
    // Predicated region
    $region10: #{tpu_custom_call.1} parent=1 // pred_check
      _
    $region11: #{tpu_custom_call.1} parent=1 // pred_check_branch
      %59 = sbr.rel (0) target = $region13
    $region12: #{tpu_custom_call.1} parent=1 // pred_region
      %s61 = ssub.s32 128, 128
      %62 = vsyncadd [#allocation4], %s61
      %s64 = sshll.u32 [#allocation5], 4
      %s65 = int_to_ptr.vmem [resolvable:$true] %s64
      %67 = dma.vmem_to_hbm [thread:$0]  %s65, 128, %s1, [#allocation4]
    $region13: #{tpu_custom_call.1} parent=1 // pred_fallthru
      _
    // Predicated region
    $region14: #{tpu_custom_call.1} parent=1 // pred_check
      _
    $region15: #{tpu_custom_call.1} parent=1 // pred_check_branch
      %69 = sbr.rel (0) target = $region17
    $region16: #{tpu_custom_call.1} parent=1 // pred_region
      %70 = dma.done [#allocation4], 128
    $region17: #{tpu_custom_call.1} parent=1 // pred_fallthru
      _
    %71 = vsyncpa [#allocation3], 1
    %72 = vsyncpa [#allocation4], 1

</llo_original>
